<compile_context>
chip_gen: v7x
topology: tpu7x:2x2x1
jax: 0.10.0
libtpu: 0.0.40
codegen_flags: <defaults>
</compile_context>

<pallas_src>
import functools

import jax
import jax.numpy as jnp
from jax import lax
from jax.experimental import pallas as pl
from jax.experimental.pallas import tpu as pltpu


def _same_pad(kernel_size: int, dilation: int):
    """PyTorch Conv2d padding='same' rule: total = d*(k-1), left = total//2."""
    total = dilation * (kernel_size - 1)
    lo = total // 2
    return lo, total - lo


def _choose_row_tile(rows, hw, x_bytes, out_bytes, budget=12 << 20):
    """Largest row tile whose double-buffered in+out blocks fit the VMEM budget."""
    per_row = 2 * hw * (x_bytes + out_bytes)          # double-buffered in + out
    max_rows = max(1, budget // per_row)
    if rows <= max_rows:
        return rows                                    # full extent (always legal)
    tr = min(rows, (max_rows // 8) * 8)
    while tr >= 8:
        if rows % tr == 0:                             # divides rows, multiple of 8
            return tr
        tr -= 8
    return rows                                        # fallback: single full block


def _make_axial_dw_kernel(H, W, kh, kw, dil, ph, pw, out_dtype):
    HW = H * W

    def kernel(x_ref, wh_ref, ww_ref, b_ref, hidx_ref, widx_ref, o_ref):
        x = x_ref[...].astype(jnp.float32)      # (TR, HW)  rows = fused (batch, chan)
        wh = wh_ref[...].astype(jnp.float32)    # (TR, kh)  per-row taps along H
        ww = ww_ref[...].astype(jnp.float32)    # (TR, kw)  per-row taps along W
        b = b_ref[...].astype(jnp.float32)      # (TR, 1)   bias_h + bias_w
        h_idx = hidx_ref[...]                   # (1, HW) int32: lane -> h coordinate
        w_idx = widx_ref[...]                   # (1, HW) int32: lane -> w coordinate

        # Residual + combined bias (lane-broadcast of a (TR,1) column).
        acc = x + b

        def tap_contrib(off_elems, lo, hi, full, idx, tap):
            # out[f] += tap * x[f + off_elems], valid only where lo <= idx < hi.
            shift = (-off_elems) % HW
            rolled = pltpu.roll(x, shift=shift, axis=1) if shift else x
            if lo == 0 and hi == full:              # interior tap: no mask needed
                return rolled * tap
            mask = (idx >= lo) & (idx < hi)         # (1, HW), broadcasts over rows
            return jnp.where(mask, rolled, 0.0) * tap

        # Depthwise conv along H: out[h, w] += wh[t] * x[h + t*dil - ph, w]
        for t in range(kh):
            off = t * dil - ph
            lo, hi = max(0, -off), min(H, H - off)
            if lo >= hi:
                continue
            acc = acc + tap_contrib(off * W, lo, hi, H, h_idx, wh[:, t:t + 1])

        # Depthwise conv along W: out[h, w] += ww[t] * x[h, w + t*dil - pw]
        for t in range(kw):
            off = t * dil - pw
            lo, hi = max(0, -off), min(W, W - off)
            if lo >= hi:
                continue
            acc = acc + tap_contrib(off, lo, hi, W, w_idx, ww[:, t:t + 1])

        o_ref[...] = acc.astype(out_dtype)

    return kernel


@functools.partial(jax.jit, static_argnames=("mixer_kernel", "dilation"))
def axial_dw(x, wh, bh, ww, bw, *, mixer_kernel=(3, 3), dilation=1):
    """x: (N, C, H, W). wh: (C, kh), ww: (C, kw), bh/bw: (C,). Returns (N, C, H, W)."""
    N, C, H, W = x.shape
    kh, kw = mixer_kernel
    ph, _ = _same_pad(kh, dilation)
    pw, _ = _same_pad(kw, dilation)
    # TODO(synk): for even kernel sizes re-verify PyTorch's asymmetric 'same' pad side;
    # odd kernels (the module's default (3,3)) are symmetric and exact.

    R, HW = N * C, H * W
    x2 = x.reshape(R, HW)                                        # free (contiguous) view

    # Per-row parameters (tiny vs. x): replicate per-channel taps/biases over batch.
    whr = jnp.tile(wh, (N, 1)).astype(jnp.float32)               # (R, kh)
    wwr = jnp.tile(ww, (N, 1)).astype(jnp.float32)               # (R, kw)
    br = jnp.tile((bh + bw).reshape(C, 1), (N, 1)).astype(jnp.float32)  # (R, 1)

    # Static lane->(h, w) index maps of the fused axis (constant-folded by XLA).
    f = jnp.arange(HW, dtype=jnp.int32)
    h_idx = (f // W).reshape(1, HW)
    w_idx = (f % W).reshape(1, HW)

    TR = _choose_row_tile(R, HW, x.dtype.itemsize, x.dtype.itemsize)
    grid = (R // TR,)

    kernel = _make_axial_dw_kernel(H, W, kh, kw, dilation, ph, pw, x.dtype)

    y2 = pl.pallas_call(
        kernel,
        out_shape=jax.ShapeDtypeStruct((R, HW), x.dtype),
        grid_spec=pltpu.PrefetchScalarGridSpec(
            num_scalar_prefetch=0,
            grid=grid,
            in_specs=[
                pl.BlockSpec((TR, HW), lambda r: (r, 0)),   # x rows
                pl.BlockSpec((TR, kh), lambda r: (r, 0)),   # taps along H
                pl.BlockSpec((TR, kw), lambda r: (r, 0)),   # taps along W
                pl.BlockSpec((TR, 1), lambda r: (r, 0)),    # bias_h + bias_w
                pl.BlockSpec((1, HW), lambda r: (0, 0)),    # h index per lane
                pl.BlockSpec((1, HW), lambda r: (0, 0)),    # w index per lane
            ],
            out_specs=pl.BlockSpec((TR, HW), lambda r: (r, 0)),
        ),
        compiler_params=pltpu.CompilerParams(
            dimension_semantics=("parallel",),
        ),
    )(x2, whr, wwr, br, h_idx, w_idx)

    return y2.reshape(N, C, H, W)


def axial_dw_reference(x, wh, bh, ww, bw, *, mixer_kernel=(3, 3), dilation=1):
    """Pure-JAX reference via lax.conv_general_dilated (depthwise)."""
    N, C, H, W = x.shape
    kh, kw = mixer_kernel
    ph = _same_pad(kh, dilation)
    pw = _same_pad(kw, dilation)

    rhs_h = wh.reshape(C, 1, kh, 1)
    yh = lax.conv_general_dilated(
        x, rhs_h, window_strides=(1, 1), padding=[ph, (0, 0)],
        rhs_dilation=(dilation, dilation), feature_group_count=C,
        dimension_numbers=("NCHW", "OIHW", "NCHW"),
    ) + bh.reshape(1, C, 1, 1)

    rhs_w = ww.reshape(C, 1, 1, kw)
    yw = lax.conv_general_dilated(
        x, rhs_w, window_strides=(1, 1), padding=[(0, 0), pw],
        rhs_dilation=(dilation, dilation), feature_group_count=C,
        dimension_numbers=("NCHW", "OIHW", "NCHW"),
    ) + bw.reshape(1, C, 1, 1)

    return x + yh + yw


if __name__ == "__main__":
    # Shapes consistent with AxialDW(dim=4, mixer_kernel=(3, 3)).
    N, C, H, W = 2, 4, 16, 16
    kh, kw = 3, 3

    key = jax.random.PRNGKey(0)
    kx, kwh, kbh, kww, kbw = jax.random.split(key, 5)

    x = jax.random.normal(kx, (N, C, H, W), dtype=jnp.float32)
    wh = 0.1 * jax.random.normal(kwh, (C, kh), dtype=jnp.float32)
    bh = 0.1 * jax.random.normal(kbh, (C,), dtype=jnp.float32)
    ww = 0.1 * jax.random.normal(kww, (C, kw), dtype=jnp.float32)
    bw = 0.1 * jax.random.normal(kbw, (C,), dtype=jnp.float32)

    for dil in (1, 2):
        y = axial_dw(x, wh, bh, ww, bw, mixer_kernel=(kh, kw), dilation=dil)
        y = jax.block_until_ready(y)
        y_ref = axial_dw_reference(x, wh, bh, ww, bw, mixer_kernel=(kh, kw), dilation=dil)
        assert y.shape == (N, C, H, W)
        assert jnp.allclose(y, y_ref, rtol=1e-5, atol=1e-5), f"mismatch at dilation={dil}"

    print("KERNEL_OK")
</pallas_src>

<mosaic_0001>
module attributes {stable_mosaic.version = 11 : i64} {
  func.func @kernel(%arg0: i32, %arg1: memref<8x256xf32, #tpu.memory_space<vmem>>, %arg2: memref<8x3xf32, #tpu.memory_space<vmem>>, %arg3: memref<8x3xf32, #tpu.memory_space<vmem>>, %arg4: memref<8x1xf32, #tpu.memory_space<vmem>>, %arg5: memref<1x256xi32, #tpu.memory_space<vmem>>, %arg6: memref<1x256xi32, #tpu.memory_space<vmem>>, %arg7: memref<8x256xf32, #tpu.memory_space<vmem>>) attributes {dimension_semantics = [#tpu.dimension_semantics<parallel>], iteration_bounds = array<i64: 1>, scalar_prefetch = 0 : i64, scratch_operands = 0 : i64, tpu.core_type = #tpu.core_type<tc>, window_params = [{transform_indices = @transform_0, window_bounds = array<i64: 8, 256>}, {transform_indices = @transform_1, window_bounds = array<i64: 8, 3>}, {transform_indices = @transform_2, window_bounds = array<i64: 8, 3>}, {transform_indices = @transform_3, window_bounds = array<i64: 8, 1>}, {pipeline_mode = #tpu.pipeline_mode<synchronous>, transform_indices = @transform_4, window_bounds = array<i64: 1, 256>}, {pipeline_mode = #tpu.pipeline_mode<synchronous>, transform_indices = @transform_5, window_bounds = array<i64: 1, 256>}, {transform_indices = @transform_6, window_bounds = array<i64: 8, 256>}]} {
    %c0 = arith.constant 0 : index
    %c0_0 = arith.constant 0 : index
    %0 = vector.load %arg1[%c0, %c0_0] : memref<8x256xf32, #tpu.memory_space<vmem>>, vector<8x256xf32>
    %c0_1 = arith.constant 0 : index
    %c0_2 = arith.constant 0 : index
    %1 = vector.load %arg2[%c0_1, %c0_2] : memref<8x3xf32, #tpu.memory_space<vmem>>, vector<8x3xf32>
    %c0_3 = arith.constant 0 : index
    %c0_4 = arith.constant 0 : index
    %2 = vector.load %arg3[%c0_3, %c0_4] : memref<8x3xf32, #tpu.memory_space<vmem>>, vector<8x3xf32>
    %c0_5 = arith.constant 0 : index
    %c0_6 = arith.constant 0 : index
    %3 = vector.load %arg4[%c0_5, %c0_6] : memref<8x1xf32, #tpu.memory_space<vmem>>, vector<8x1xf32>
    %c0_7 = arith.constant 0 : index
    %c0_8 = arith.constant 0 : index
    %4 = vector.load %arg5[%c0_7, %c0_8] : memref<1x256xi32, #tpu.memory_space<vmem>>, vector<1x256xi32>
    %c0_9 = arith.constant 0 : index
    %c0_10 = arith.constant 0 : index
    %5 = vector.load %arg6[%c0_9, %c0_10] : memref<1x256xi32, #tpu.memory_space<vmem>>, vector<1x256xi32>
    %6 = vector.broadcast %3 : vector<8x1xf32> to vector<8x256xf32>
    %7 = arith.addf %0, %6 : vector<8x256xf32>
    %8 = vector.extract_strided_slice %1 {offsets = [0, 0], sizes = [8, 1], strides = [1, 1]} : vector<8x3xf32> to vector<8x1xf32>
    %c16_i32 = arith.constant 16 : i32
    %9 = tpu.dynamic_rotate %0 by %c16_i32 dim 1 : vector<8x256xf32>, i32 -> vector<8x256xf32>
    %c1_i32 = arith.constant 1 : i32
    %10 = vector.broadcast %c1_i32 : i32 to vector<1x256xi32>
    %11 = arith.cmpi sge, %4, %10 : vector<1x256xi32>
    %c16_i32_11 = arith.constant 16 : i32
    %12 = vector.broadcast %c16_i32_11 : i32 to vector<1x256xi32>
    %13 = arith.cmpi slt, %4, %12 : vector<1x256xi32>
    %14 = arith.andi %11, %13 : vector<1x256xi1>
    %cst = arith.constant 0.000000e+00 : f32
    %15 = vector.shape_cast %14 : vector<1x256xi1> to vector<1x256xi1>
    %16 = vector.broadcast %15 : vector<1x256xi1> to vector<8x256xi1>
    %17 = vector.broadcast %cst : f32 to vector<8x256xf32>
    %18 = arith.select %16, %9, %17 : vector<8x256xi1>, vector<8x256xf32>
    %19 = vector.broadcast %8 : vector<8x1xf32> to vector<8x256xf32>
    %20 = arith.mulf %18, %19 : vector<8x256xf32>
    %21 = arith.addf %7, %20 : vector<8x256xf32>
    %22 = vector.extract_strided_slice %1 {offsets = [0, 1], sizes = [8, 1], strides = [1, 1]} : vector<8x3xf32> to vector<8x1xf32>
    %23 = vector.broadcast %22 : vector<8x1xf32> to vector<8x256xf32>
    %24 = arith.mulf %0, %23 : vector<8x256xf32>
    %25 = arith.addf %21, %24 : vector<8x256xf32>
    %26 = vector.extract_strided_slice %1 {offsets = [0, 2], sizes = [8, 1], strides = [1, 1]} : vector<8x3xf32> to vector<8x1xf32>
    %c240_i32 = arith.constant 240 : i32
    %27 = tpu.dynamic_rotate %0 by %c240_i32 dim 1 : vector<8x256xf32>, i32 -> vector<8x256xf32>
    %c0_i32 = arith.constant 0 : i32
    %28 = vector.broadcast %c0_i32 : i32 to vector<1x256xi32>
    %29 = arith.cmpi sge, %4, %28 : vector<1x256xi32>
    %c15_i32 = arith.constant 15 : i32
    %30 = vector.broadcast %c15_i32 : i32 to vector<1x256xi32>
    %31 = arith.cmpi slt, %4, %30 : vector<1x256xi32>
    %32 = arith.andi %29, %31 : vector<1x256xi1>
    %cst_12 = arith.constant 0.000000e+00 : f32
    %33 = vector.shape_cast %32 : vector<1x256xi1> to vector<1x256xi1>
    %34 = vector.broadcast %33 : vector<1x256xi1> to vector<8x256xi1>
    %35 = vector.broadcast %cst_12 : f32 to vector<8x256xf32>
    %36 = arith.select %34, %27, %35 : vector<8x256xi1>, vector<8x256xf32>
    %37 = vector.broadcast %26 : vector<8x1xf32> to vector<8x256xf32>
    %38 = arith.mulf %36, %37 : vector<8x256xf32>
    %39 = arith.addf %25, %38 : vector<8x256xf32>
    %40 = vector.extract_strided_slice %2 {offsets = [0, 0], sizes = [8, 1], strides = [1, 1]} : vector<8x3xf32> to vector<8x1xf32>
    %c1_i32_13 = arith.constant 1 : i32
    %41 = tpu.dynamic_rotate %0 by %c1_i32_13 dim 1 : vector<8x256xf32>, i32 -> vector<8x256xf32>
    %c1_i32_14 = arith.constant 1 : i32
    %42 = vector.broadcast %c1_i32_14 : i32 to vector<1x256xi32>
    %43 = arith.cmpi sge, %5, %42 : vector<1x256xi32>
    %c16_i32_15 = arith.constant 16 : i32
    %44 = vector.broadcast %c16_i32_15 : i32 to vector<1x256xi32>
    %45 = arith.cmpi slt, %5, %44 : vector<1x256xi32>
    %46 = arith.andi %43, %45 : vector<1x256xi1>
    %cst_16 = arith.constant 0.000000e+00 : f32
    %47 = vector.shape_cast %46 : vector<1x256xi1> to vector<1x256xi1>
    %48 = vector.broadcast %47 : vector<1x256xi1> to vector<8x256xi1>
    %49 = vector.broadcast %cst_16 : f32 to vector<8x256xf32>
    %50 = arith.select %48, %41, %49 : vector<8x256xi1>, vector<8x256xf32>
    %51 = vector.broadcast %40 : vector<8x1xf32> to vector<8x256xf32>
    %52 = arith.mulf %50, %51 : vector<8x256xf32>
    %53 = arith.addf %39, %52 : vector<8x256xf32>
    %54 = vector.extract_strided_slice %2 {offsets = [0, 1], sizes = [8, 1], strides = [1, 1]} : vector<8x3xf32> to vector<8x1xf32>
    %55 = vector.broadcast %54 : vector<8x1xf32> to vector<8x256xf32>
    %56 = arith.mulf %0, %55 : vector<8x256xf32>
    %57 = arith.addf %53, %56 : vector<8x256xf32>
    %58 = vector.extract_strided_slice %2 {offsets = [0, 2], sizes = [8, 1], strides = [1, 1]} : vector<8x3xf32> to vector<8x1xf32>
    %c255_i32 = arith.constant 255 : i32
    %59 = tpu.dynamic_rotate %0 by %c255_i32 dim 1 : vector<8x256xf32>, i32 -> vector<8x256xf32>
    %c0_i32_17 = arith.constant 0 : i32
    %60 = vector.broadcast %c0_i32_17 : i32 to vector<1x256xi32>
    %61 = arith.cmpi sge, %5, %60 : vector<1x256xi32>
    %c15_i32_18 = arith.constant 15 : i32
    %62 = vector.broadcast %c15_i32_18 : i32 to vector<1x256xi32>
    %63 = arith.cmpi slt, %5, %62 : vector<1x256xi32>
    %64 = arith.andi %61, %63 : vector<1x256xi1>
    %cst_19 = arith.constant 0.000000e+00 : f32
    %65 = vector.shape_cast %64 : vector<1x256xi1> to vector<1x256xi1>
    %66 = vector.broadcast %65 : vector<1x256xi1> to vector<8x256xi1>
    %67 = vector.broadcast %cst_19 : f32 to vector<8x256xf32>
    %68 = arith.select %66, %59, %67 : vector<8x256xi1>, vector<8x256xf32>
    %69 = vector.broadcast %58 : vector<8x1xf32> to vector<8x256xf32>
    %70 = arith.mulf %68, %69 : vector<8x256xf32>
    %71 = arith.addf %57, %70 : vector<8x256xf32>
    %c0_20 = arith.constant 0 : index
    %c0_21 = arith.constant 0 : index
    %72 = vector.load %arg7[%c0_20, %c0_21] : memref<8x256xf32, #tpu.memory_space<vmem>>, vector<8x256xf32>
    tpu.vector_store %arg7[%c0_20, %c0_21], %71 {strides = array<i32>} : memref<8x256xf32, #tpu.memory_space<vmem>>, vector<8x256xf32>,
    return
  }
  func.func @transform_0(%arg0: i32) -> (i32, i32) {
    %c0_i32 = arith.constant 0 : i32
    %c0_i32_0 = arith.constant 0 : i32
    return %arg0, %c0_i32 : i32, i32
  }
  func.func @transform_1(%arg0: i32) -> (i32, i32) {
    %c0_i32 = arith.constant 0 : i32
    %c0_i32_0 = arith.constant 0 : i32
    return %arg0, %c0_i32 : i32, i32
  }
  func.func @transform_2(%arg0: i32) -> (i32, i32) {
    %c0_i32 = arith.constant 0 : i32
    %c0_i32_0 = arith.constant 0 : i32
    return %arg0, %c0_i32 : i32, i32
  }
  func.func @transform_3(%arg0: i32) -> (i32, i32) {
    %c0_i32 = arith.constant 0 : i32
    %c0_i32_0 = arith.constant 0 : i32
    return %arg0, %c0_i32 : i32, i32
  }
  func.func @transform_4(%arg0: i32) -> (i32, i32) {
    %c0_i32 = arith.constant 0 : i32
    %c0_i32_0 = arith.constant 0 : i32
    %c0_i32_1 = arith.constant 0 : i32
    return %c0_i32, %c0_i32_0 : i32, i32
  }
  func.func @transform_5(%arg0: i32) -> (i32, i32) {
    %c0_i32 = arith.constant 0 : i32
    %c0_i32_0 = arith.constant 0 : i32
    %c0_i32_1 = arith.constant 0 : i32
    return %c0_i32, %c0_i32_0 : i32, i32
  }
  func.func @transform_6(%arg0: i32) -> (i32, i32) {
    %c0_i32 = arith.constant 0 : i32
    %c0_i32_0 = arith.constant 0 : i32
    return %arg0, %c0_i32 : i32, i32
  }
}

</mosaic_0001>

<llo_original>
// kernel: axial_dw.1
$region0: #{axial_dw.1}
  #allocation0 [shape = 'u32[]', space=smem, size = 0x4, offset = 0x4, fixed_abs, tag = 'smem constant byte address 0x4 - core index']
  #allocation1 [shape = 'u32[144,128]{1,0:T(1,128)}', space=vmem, size = 0x12000, scoped, tag = 'internal scratch']
  %s0 = inlined_call_operand.vmem [shape: f32[8,256], index: 0, kind: input, shape index: {}]
  %s1 = inlined_call_operand.vmem [shape: f32[8,3], index: 1, kind: input, shape index: {}]
  %s2 = inlined_call_operand.vmem [shape: f32[8,3], index: 2, kind: input, shape index: {}]
  %s3 = inlined_call_operand.vmem [shape: f32[8,1], index: 3, kind: input, shape index: {}]
  %s4 = inlined_call_operand.vmem [shape: s32[1,256], index: 4, kind: input, shape index: {}]
  %s5 = inlined_call_operand.vmem [shape: s32[1,256], index: 5, kind: input, shape index: {}]
  %s6 = inlined_call_operand.vmem [shape: f32[8,256], index: 6, kind: output, shape index: {}]
  %s7 = sld [smem:[#allocation0]]
  $region34: #{axial_dw.1} parent=0
    _
  %s9 = ssub.s32 1, %s7
  %s10 = scalar_select 0, %s9, %s7
  // Predicated region
  $region2: #{axial_dw.1} parent=0 // pred_check
    _
  $region3: #{axial_dw.1} parent=0 // pred_check_branch
    %12 = sbr.rel (0) target = $region5
  $region4: #{axial_dw.1} parent=0 // pred_region
    _
  $region5: #{axial_dw.1} parent=0 // pred_fallthru
    _
  // Predicated region
  $region6: #{axial_dw.1} parent=0 // pred_check
    _
  $region7: #{axial_dw.1} parent=0 // pred_check_branch
    %14 = sbr.rel (0) target = $region9
  $region8: #{axial_dw.1} parent=0 // pred_region
    _
  $region9: #{axial_dw.1} parent=0 // pred_fallthru
    _
  // Predicated region
  $region10: #{axial_dw.1} parent=0 // pred_check
    _
  $region11: #{axial_dw.1} parent=0 // pred_check_branch
    %16 = sbr.rel (0) target = $region13
  $region12: #{axial_dw.1} parent=0 // pred_region
    _
  $region13: #{axial_dw.1} parent=0 // pred_fallthru
    _
  // Predicated region
  $region14: #{axial_dw.1} parent=0 // pred_check
    _
  $region15: #{axial_dw.1} parent=0 // pred_check_branch
    %18 = sbr.rel (0) target = $region17
  $region16: #{axial_dw.1} parent=0 // pred_region
    _
  $region17: #{axial_dw.1} parent=0 // pred_fallthru
    _
  // Predicated region
  $region18: #{axial_dw.1} parent=0 // pred_check
    _
  $region19: #{axial_dw.1} parent=0 // pred_check_branch
    %20 = sbr.rel (0) target = $region21
  $region20: #{axial_dw.1} parent=0 // pred_region
    _
  $region21: #{axial_dw.1} parent=0 // pred_fallthru
    _
  // Predicated region
  $region22: #{axial_dw.1} parent=0 // pred_check
    _
  $region23: #{axial_dw.1} parent=0 // pred_check_branch
    %22 = sbr.rel (0) target = $region25
  $region24: #{axial_dw.1} parent=0 // pred_region
    _
  $region25: #{axial_dw.1} parent=0 // pred_fallthru
    _
  %v23 = vld [vmem:[%s0] sm:$0xff]
  %v24 = vld [vmem:[%s0 + $0x8] sm:$0xff]
  %v25 = vld [vmem:[%s1] sm:$0xff]
  %v26 = vld [vmem:[%s2] sm:$0xff]
  %v27 = vld [vmem:[%s3] sm:$0xff]
  %v28 = vld [vmem:[%s4] sm:$0x3]
  %v29 = vld [vmem:[%s5] sm:$0x3]
  %31 = vset.pattern.permute.xlu0 0
  %32 = vperm.xlu0 %31, %v27
  %v33 = vpop.permute.xlu0 %32
  %v35 = vadd.f32 %v23, %v33
  %v36 = vadd.f32 %v24, %v33
  %37 = vrot.lane.b32.xlu0 %v23, 16
  %v38 = vpop.permute.xlu0 %37
  %39 = vrot.lane.b32.xlu0 %v24, 16
  %v40 = vpop.permute.xlu0 %39
  %v41 = vlaneseq
  %v42 = vand.u32 %v41, 127
  %vm43 = vcmp.lt.s32.totalorder %v42, 16
  %v44 = vsel %vm43, %v38, %v40
  %v45 = vsel %vm43, %v40, %v38
  %vm46 = vcmp.ge.s32.totalorder %v28, 1
  %vm47 = vcmp.lt.s32.totalorder %v28, 16
  %vm48 = vmand %vm46, %vm47
  %v49 = vsel %vm48, 1, 0
  %v50 = vlaneseq
  %v51 = vshrl.u32 %v50, 7
  %v52 = vsub.s32 0, %v51
  %v53 = vrot.slane %v49, %v52
  %v54 = vlaneseq
  %v55 = vshrl.u32 %v54, 7
  %v56 = vsub.s32 1, %v55
  %v57 = vrot.slane %v49, %v56
  %vm58 = vcmp.eq.s32.totalorder %v53, 1
  %vm59 = vcmp.eq.s32.totalorder %v57, 1
  %v60 = vsel %vm58, %v45, 0.0
  %v61 = vsel %vm59, %v44, 0.0
  %63 = vset.pattern.permute.xlu0 0
  %64 = vperm.xlu0 %63, %v25
  %v65 = vpop.permute.xlu0 %64
  %v67 = vmul.f32 %v60, %v65
  %v68 = vmul.f32 %v61, %v65
  %v69 = vadd.f32 %v35, %v67
  %v70 = vadd.f32 %v36, %v68
  %71 = vset.pattern.permute.xlu0 1
  %72 = vperm.xlu0 %71, %v25
  %v73 = vpop.permute.xlu0 %72
  %v75 = vmul.f32 %v23, %v73
  %v76 = vmul.f32 %v24, %v73
  %v77 = vadd.f32 %v69, %v75
  %v78 = vadd.f32 %v70, %v76
  %79 = vrot.lane.b32.xlu0 %v23, 112
  %v80 = vpop.permute.xlu0 %79
  %81 = vrot.lane.b32.xlu0 %v24, 112
  %v82 = vpop.permute.xlu0 %81
  %vm83 = vcmp.lt.s32.totalorder %v42, 112
  %v84 = vsel %vm83, %v80, %v82
  %v85 = vsel %vm83, %v82, %v80
  %vm86 = vcmp.ge.s32.totalorder %v28, 0
  %vm87 = vcmp.lt.s32.totalorder %v28, 15
  %vm88 = vmand %vm86, %vm87
  %v89 = vsel %vm88, 1, 0
  %v90 = vlaneseq
  %v91 = vshrl.u32 %v90, 7
  %v92 = vsub.s32 0, %v91
  %v93 = vrot.slane %v89, %v92
  %v94 = vlaneseq
  %v95 = vshrl.u32 %v94, 7
  %v96 = vsub.s32 1, %v95
  %v97 = vrot.slane %v89, %v96
  %vm98 = vcmp.eq.s32.totalorder %v93, 1
  %vm99 = vcmp.eq.s32.totalorder %v97, 1
  %v100 = vsel %vm98, %v84, 0.0
  %v101 = vsel %vm99, %v85, 0.0
  %102 = vset.pattern.permute.xlu0 2
  %103 = vperm.xlu0 %102, %v25
  %v104 = vpop.permute.xlu0 %103
  %v106 = vmul.f32 %v100, %v104
  %v107 = vmul.f32 %v101, %v104
  %v108 = vadd.f32 %v77, %v106
  %v109 = vadd.f32 %v78, %v107
  %110 = vrot.lane.b32.xlu0 %v23, 1
  %v111 = vpop.permute.xlu0 %110
  %112 = vrot.lane.b32.xlu0 %v24, 1
  %v113 = vpop.permute.xlu0 %112
  %vm114 = vcmp.lt.s32.totalorder %v42, 1
  %v115 = vsel %vm114, %v111, %v113
  %v116 = vsel %vm114, %v113, %v111
  %vm117 = vcmp.ge.s32.totalorder %v29, 1
  %vm118 = vcmp.lt.s32.totalorder %v29, 16
  %vm119 = vmand %vm117, %vm118
  %v120 = vsel %vm119, 1, 0
  %v121 = vlaneseq
  %v122 = vshrl.u32 %v121, 7
  %v123 = vsub.s32 0, %v122
  %v124 = vrot.slane %v120, %v123
  %v125 = vlaneseq
  %v126 = vshrl.u32 %v125, 7
  %v127 = vsub.s32 1, %v126
  %v128 = vrot.slane %v120, %v127
  %vm129 = vcmp.eq.s32.totalorder %v124, 1
  %vm130 = vcmp.eq.s32.totalorder %v128, 1
  %v131 = vsel %vm129, %v116, 0.0
  %v132 = vsel %vm130, %v115, 0.0
  %134 = vset.pattern.permute.xlu0 0
  %135 = vperm.xlu0 %134, %v26
  %v136 = vpop.permute.xlu0 %135
  %v138 = vmul.f32 %v131, %v136
  %v139 = vmul.f32 %v132, %v136
  %v140 = vadd.f32 %v108, %v138
  %v141 = vadd.f32 %v109, %v139
  %142 = vset.pattern.permute.xlu0 1
  %143 = vperm.xlu0 %142, %v26
  %v144 = vpop.permute.xlu0 %143
  %v146 = vmul.f32 %v23, %v144
  %v147 = vmul.f32 %v24, %v144
  %v148 = vadd.f32 %v140, %v146
  %v149 = vadd.f32 %v141, %v147
  %150 = vrot.lane.b32.xlu0 %v23, 127
  %v151 = vpop.permute.xlu0 %150
  %152 = vrot.lane.b32.xlu0 %v24, 127
  %v153 = vpop.permute.xlu0 %152
  %vm154 = vcmp.lt.s32.totalorder %v42, 127
  %v155 = vsel %vm154, %v151, %v153
  %v156 = vsel %vm154, %v153, %v151
  %vm157 = vcmp.ge.s32.totalorder %v29, 0
  %vm158 = vcmp.lt.s32.totalorder %v29, 15
  %vm159 = vmand %vm157, %vm158
  %v160 = vsel %vm159, 1, 0
  %v161 = vlaneseq
  %v162 = vshrl.u32 %v161, 7
  %v163 = vsub.s32 0, %v162
  %v164 = vrot.slane %v160, %v163
  %v165 = vlaneseq
  %v166 = vshrl.u32 %v165, 7
  %v167 = vsub.s32 1, %v166
  %v168 = vrot.slane %v160, %v167
  %vm169 = vcmp.eq.s32.totalorder %v164, 1
  %vm170 = vcmp.eq.s32.totalorder %v168, 1
  %v171 = vsel %vm169, %v155, 0.0
  %v172 = vsel %vm170, %v156, 0.0
  %173 = vset.pattern.permute.xlu0 2
  %174 = vperm.xlu0 %173, %v26
  %v175 = vpop.permute.xlu0 %174
  %v177 = vmul.f32 %v171, %v175
  %v178 = vmul.f32 %v172, %v175
  %v179 = vadd.f32 %v148, %v177
  %v180 = vadd.f32 %v149, %v178
  %181 = vst [vmem:[%s6] sm:$0xff] %v179
  %182 = vst [vmem:[%s6 + $0x8] sm:$0xff] %v180
  // Predicated region
  $region26: #{axial_dw.1} parent=0 // pred_check
    _
  $region27: #{axial_dw.1} parent=0 // pred_check_branch
    %184 = sbr.rel (0) target = $region29
  $region28: #{axial_dw.1} parent=0 // pred_region
    _
  $region29: #{axial_dw.1} parent=0 // pred_fallthru
    _
  // Predicated region
  $region30: #{axial_dw.1} parent=0 // pred_check
    _
  $region31: #{axial_dw.1} parent=0 // pred_check_branch
    %186 = sbr.rel (0) target = $region33
  $region32: #{axial_dw.1} parent=0 // pred_region
    _
  $region33: #{axial_dw.1} parent=0 // pred_fallthru
    _

</llo_original>
